<compile_context>
chip_gen: v6e
topology: v6e:2x2x1
jax: 0.10.0
libtpu: 0.0.40
codegen_flags: <defaults>
</compile_context>

<pallas_src>
import functools

import jax
import jax.numpy as jnp
from jax.experimental import pallas as pl
from jax.experimental.pallas import tpu as pltpu

LANES = 128
SUBLANES = 8
VMEM_LIMIT_BYTES = 32 * 1024 * 1024  # safe explicit scoped-VMEM limit on v5e/v6e/v7x


def _round_up(a, b):
    return ((a + b - 1) // b) * b


def _device_kind():
    try:
        return jax.devices()[0].device_kind.lower()
    except Exception:
        return ""


def _default_num_splits(kind):
    # Chips with >1 TensorCore per chip benefit from a "parallel" leading grid
    # axis (DMA sharded across TCs).  On single-TC chips it is pure overhead.
    return 2 if any(tag in kind for tag in ("v4", "v5p", "v7")) else 1


def _default_max_block_rows(kind):
    # v5e (~0.82 TB/s, 16 MiB default scoped VMEM): 4096 rows (2 MiB/input)
    # already reaches ~90% of roofline.  v6e/v7x: 8192 rows (4 MiB/input).
    if "v5e" in kind or "v5 lite" in kind or "v5lite" in kind:
        return 4096
    return 8192


def _mse_partial_kernel(x_ref, t_ref, acc_ref, *, weight, rows_valid,
                        block_rows, nb_per_split, needs_mask):
    # x_ref, t_ref : (block_rows, 128) VMEM tiles (x in native dtype; cast here)
    # acc_ref      : (8, 128) f32 output block, resident across grid axis 1
    s = pl.program_id(0)
    j = pl.program_id(1)

    @pl.when(j == 0)
    def _():
        acc_ref[...] = jnp.zeros_like(acc_ref)

    d = x_ref[...].astype(jnp.float32) * weight - t_ref[...].astype(jnp.float32)
    dd = d * d

    if needs_mask:
        # Zero the rows past the slab's true row count (trailing partial block
        # and any fully out-of-range clamped block).  Pure VPU work.
        row0 = (s * nb_per_split + j) * block_rows
        rows = row0 + jax.lax.broadcasted_iota(jnp.int32, (block_rows, LANES), 0)
        dd = jnp.where(rows < rows_valid, dd, 0.0)

    # Fold the block's rows onto one (8,128) vreg tile: element-wise adds only;
    # the single cross-lane/sublane reduction happens in the fused epilogue.
    acc_ref[...] += jnp.sum(dd.reshape(-1, SUBLANES, LANES), axis=0)


def _build_mse_call(rows_padded, weight, num_splits, max_block_rows):
    block_rows = min(max_block_rows,
                     _round_up(pl.cdiv(rows_padded, num_splits), SUBLANES))
    nb_total = pl.cdiv(rows_padded, block_rows)
    num_splits = max(1, min(num_splits, nb_total))
    nb_per_split = pl.cdiv(nb_total, num_splits)
    covered_rows = num_splits * nb_per_split * block_rows
    needs_mask = covered_rows > rows_padded

    def in_map(s, j):
        # Clamp so a fully out-of-range logical block (uneven split) re-reads
        # the last valid block; its contribution is masked to zero in-kernel.
        return (jnp.minimum(s * nb_per_split + j, nb_total - 1), 0)

    kernel = functools.partial(
        _mse_partial_kernel, weight=float(weight), rows_valid=rows_padded,
        block_rows=block_rows, nb_per_split=nb_per_split, needs_mask=needs_mask)

    return pl.pallas_call(
        kernel,
        out_shape=jax.ShapeDtypeStruct((num_splits * SUBLANES, LANES), jnp.float32),
        grid_spec=pltpu.PrefetchScalarGridSpec(
            num_scalar_prefetch=0,
            grid=(num_splits, nb_per_split),
            in_specs=[
                pl.BlockSpec((block_rows, LANES), in_map),   # input tiles
                pl.BlockSpec((block_rows, LANES), in_map),   # pre-scaled target tiles
            ],
            out_specs=pl.BlockSpec((SUBLANES, LANES), lambda s, j: (s, 0)),
        ),
        compiler_params=pltpu.CompilerParams(
            dimension_semantics=("parallel", "arbitrary"),
            vmem_limit_bytes=VMEM_LIMIT_BYTES),
    )


class L2LossPallas:
    """Mirror of the PyTorch L2Loss module (forward pass only)."""

    def __init__(self, target, weight, *, target_in_bf16=False,
                 num_splits=None, max_block_rows=None):
        self.weight = float(weight)
        # target.detach() * weight -- done once at init (constant tensor).
        self.target = jax.lax.stop_gradient(jnp.asarray(target)) * self.weight
        self._n = int(self.target.size)
        # Minimal layout padding: rows to a SUBLANES multiple only.
        self._rows = _round_up(pl.cdiv(self._n, LANES), SUBLANES)

        # Pre-scaled, lane-dense (rows, 128) target slab, built once.
        t_slab = self._to_slab(self.target.astype(jnp.float32))
        if target_in_bf16:
            # Optional: halves the constant's HBM traffic (~25% less total
            # traffic for f32 inputs) at the cost of rounding the target.
            t_slab = t_slab.astype(jnp.bfloat16)
        self._target_slab = t_slab

        kind = _device_kind()
        if num_splits is None:
            num_splits = _default_num_splits(kind)
        if max_block_rows is None:
            max_block_rows = _default_max_block_rows(kind)

        mse_call = _build_mse_call(self._rows, self.weight, num_splits,
                                   max_block_rows)
        inv_n = 1.0 / self._n

        def _loss_fn(x, t_slab_arg):
            # Slab prep + pallas_call + scalar epilogue fused under one jit:
            # the reshape is metadata-only whenever numel is already a
            # multiple of rows*128 (no extra HBM copy).
            x_slab = self._to_slab(x)
            tiles = mse_call(x_slab, t_slab_arg)
            return jnp.sum(tiles) * inv_n

        self._loss_fn = jax.jit(_loss_fn)
        self.loss = None
        self.output = None

    def _to_slab(self, arr):
        flat = jnp.ravel(arr)
        pad = self._rows * LANES - flat.shape[0]
        if pad:  # only when numel is not already a multiple of 1024
            flat = jnp.pad(flat, (0, pad))
        return flat.reshape(self._rows, LANES)

    def forward(self, inp):
        inp = jnp.asarray(inp)
        assert inp.size == self._n, "input shape must match target shape"
        self.loss = self._loss_fn(inp, self._target_slab)
        self.output = inp                      # forward returns the input unchanged
        return self.output

    __call__ = forward

    # TODO(synk): backward() (autograd .backward on the stored loss) is not a
    # forward-pass op; not implemented here.


if __name__ == "__main__":
    key = jax.random.PRNGKey(0)
    k1, k2, k3, k4, k5, k6 = jax.random.split(key, 6)

    # --- Primary case: small NCHW feature map (as seen from a conv layer). ---
    x = jax.random.normal(k1, (2, 4, 16, 16), dtype=jnp.float32)
    raw_target = jax.random.normal(k2, (2, 4, 16, 16), dtype=jnp.float32)
    weight = 0.5

    mod = L2LossPallas(raw_target, weight)
    out = jax.block_until_ready(mod.forward(x))
    loss = jax.block_until_ready(mod.loss)

    ref_loss = jnp.mean((x * weight - jax.lax.stop_gradient(raw_target) * weight) ** 2)
    assert jnp.allclose(out, x), "output must be the unmodified input"
    assert jnp.allclose(loss, ref_loss, rtol=1e-6, atol=1e-6), (loss, ref_loss)

    # --- Secondary case: trailing partial block + split -> exercises the
    #     in-kernel row masking and block-index clamping paths. ---
    x2 = jax.random.normal(k3, (3, 8, 128), dtype=jnp.float32)   # 24 rows
    t2 = jax.random.normal(k4, (3, 8, 128), dtype=jnp.float32)
    mod2 = L2LossPallas(t2, 2.0, num_splits=2, max_block_rows=16)
    out2 = jax.block_until_ready(mod2.forward(x2))
    loss2 = jax.block_until_ready(mod2.loss)
    ref2 = jnp.mean((x2 * 2.0 - t2 * 2.0) ** 2)
    assert jnp.allclose(out2, x2)
    assert jnp.allclose(loss2, ref2, rtol=1e-6, atol=1e-6), (loss2, ref2)

    # --- Third case: element count not a multiple of 128 -> exercises the
    #     minimal sub-row zero-padding path. ---
    x3 = jax.random.normal(k5, (5, 201), dtype=jnp.float32)      # 1005 elements
    t3 = jax.random.normal(k6, (5, 201), dtype=jnp.float32)
    mod3 = L2LossPallas(t3, 1.5)
    out3 = jax.block_until_ready(mod3.forward(x3))
    loss3 = jax.block_until_ready(mod3.loss)
    ref3 = jnp.mean((x3 * 1.5 - t3 * 1.5) ** 2)
    assert jnp.allclose(out3, x3)
    assert jnp.allclose(loss3, ref3, rtol=1e-6, atol=1e-6), (loss3, ref3)

    print("KERNEL_OK")
</pallas_src>

<mosaic_0001>
module attributes {stable_mosaic.version = 11 : i64} {
  func.func @_mse_partial_kernel(%arg0: i32, %arg1: i32, %arg2: memref<16x128xf32, #tpu.memory_space<vmem>>, %arg3: memref<16x128xf32, #tpu.memory_space<vmem>>, %arg4: memref<8x128xf32, #tpu.memory_space<vmem>>) attributes {dimension_semantics = [#tpu.dimension_semantics<parallel>, #tpu.dimension_semantics<arbitrary>], iteration_bounds = array<i64: 1, 1>, scalar_prefetch = 0 : i64, scratch_operands = 0 : i64, tpu.core_type = #tpu.core_type<tc>, window_params = [{transform_indices = @transform_0, window_bounds = array<i64: 16, 128>}, {transform_indices = @transform_1, window_bounds = array<i64: 16, 128>}, {transform_indices = @transform_2, window_bounds = array<i64: 8, 128>}]} {
    %c0_i32 = arith.constant 0 : i32
    %0 = arith.cmpi eq, %arg1, %c0_i32 : i32
    %1 = arith.extui %0 : i1 to i32
    %c0_i32_0 = arith.constant 0 : i32
    %2 = arith.cmpi ne, %1, %c0_i32_0 : i32
    scf.if %2 {
      %cst_9 = arith.constant 0.000000e+00 : f32
      %14 = vector.broadcast %cst_9 : f32 to vector<8x128xf32>
      %c0_10 = arith.constant 0 : index
      %c0_11 = arith.constant 0 : index
      %15 = vector.load %arg4[%c0_10, %c0_11] : memref<8x128xf32, #tpu.memory_space<vmem>>, vector<8x128xf32>
      tpu.vector_store %arg4[%c0_10, %c0_11], %14 {strides = array<i32>} : memref<8x128xf32, #tpu.memory_space<vmem>>, vector<8x128xf32>,
    } else {
    }
    %c0 = arith.constant 0 : index
    %c0_1 = arith.constant 0 : index
    %3 = vector.load %arg2[%c0, %c0_1] : memref<16x128xf32, #tpu.memory_space<vmem>>, vector<16x128xf32>
    %cst = arith.constant 5.000000e-01 : f32
    %4 = vector.broadcast %cst : f32 to vector<16x128xf32>
    %5 = arith.mulf %3, %4 : vector<16x128xf32>
    %c0_2 = arith.constant 0 : index
    %c0_3 = arith.constant 0 : index
    %6 = vector.load %arg3[%c0_2, %c0_3] : memref<16x128xf32, #tpu.memory_space<vmem>>, vector<16x128xf32>
    %7 = arith.subf %5, %6 : vector<16x128xf32>
    %8 = arith.mulf %7, %7 : vector<16x128xf32>
    %c0_4 = arith.constant 0 : index
    %c0_5 = arith.constant 0 : index
    %9 = vector.load %arg4[%c0_4, %c0_5] : memref<8x128xf32, #tpu.memory_space<vmem>>, vector<8x128xf32>
    %10 = vector.shape_cast %8 : vector<16x128xf32> to vector<2x8x128xf32>
    %cst_6 = arith.constant dense<0.000000e+00> : vector<8x128xf32>
    %11 = vector.multi_reduction <add>, %10, %cst_6 [0] : vector<2x8x128xf32> to vector<8x128xf32>
    %12 = arith.addf %9, %11 : vector<8x128xf32>
    %c0_7 = arith.constant 0 : index
    %c0_8 = arith.constant 0 : index
    %13 = vector.load %arg4[%c0_7, %c0_8] : memref<8x128xf32, #tpu.memory_space<vmem>>, vector<8x128xf32>
    tpu.vector_store %arg4[%c0_7, %c0_8], %12 {strides = array<i32>} : memref<8x128xf32, #tpu.memory_space<vmem>>, vector<8x128xf32>,
    return
  }
  func.func @transform_0(%arg0: i32, %arg1: i32) -> (i32, i32) {
    %c1_i32 = arith.constant 1 : i32
    %0 = arith.muli %arg0, %c1_i32 : i32
    %1 = arith.addi %0, %arg1 : i32
    %c0_i32 = arith.constant 0 : i32
    %2 = arith.minsi %1, %c0_i32 : i32
    %c0_i32_0 = arith.constant 0 : i32
    %c0_i32_1 = arith.constant 0 : i32
    return %2, %c0_i32_0 : i32, i32
  }
  func.func @transform_1(%arg0: i32, %arg1: i32) -> (i32, i32) {
    %c1_i32 = arith.constant 1 : i32
    %0 = arith.muli %arg0, %c1_i32 : i32
    %1 = arith.addi %0, %arg1 : i32
    %c0_i32 = arith.constant 0 : i32
    %2 = arith.minsi %1, %c0_i32 : i32
    %c0_i32_0 = arith.constant 0 : i32
    %c0_i32_1 = arith.constant 0 : i32
    return %2, %c0_i32_0 : i32, i32
  }
  func.func @transform_2(%arg0: i32, %arg1: i32) -> (i32, i32) {
    %c0_i32 = arith.constant 0 : i32
    %c0_i32_0 = arith.constant 0 : i32
    return %arg0, %c0_i32 : i32, i32
  }
}

</mosaic_0001>

<llo_original>
// kernel: _loss_fn.1
$region0: #{_loss_fn.1}
  #allocation0 [shape = 'u32[]', space=smem, size = 0x4, offset = 0x4, fixed_abs, tag = 'smem constant byte address 0x4 - core index']
  #allocation1 [shape = 'u32[144,128]{1,0:T(1,128)}', space=vmem, size = 0x12000, scoped, tag = 'internal scratch']
  %s0 = inlined_call_operand.vmem [shape: f32[16,128], index: 0, kind: input, shape index: {}]
  %s1 = inlined_call_operand.vmem [shape: f32[16,128], index: 1, kind: input, shape index: {}]
  %s2 = inlined_call_operand.vmem [shape: f32[8,128], index: 2, kind: output, shape index: {}]
  %s3 = sld [smem:[#allocation0]]
  $region22: #{_loss_fn.1} parent=0
    _
  %s5 = ssub.s32 1, %s3
  %s6 = scalar_select 0, %s5, %s3
  // Predicated region
  $region2: #{_loss_fn.1} parent=0 // pred_check
    _
  $region3: #{_loss_fn.1} parent=0 // pred_check_branch
    %8 = sbr.rel (0) target = $region5
  $region4: #{_loss_fn.1} parent=0 // pred_region
    %s9 = sadd.s32 0, 0
    %p10 = scmp.lt.s32.totalorder %s9, 0
    %s11 = scalar_select %p10, %s9, 0
    %s12 = smul.u32 2, %s11
    %p13 = scmp.lt.s32.totalorder %s12, 1
    %s14 = scalar_select %p13, %s12, 1
    %s15 = smul.addr %s14, 8
    %s16 = scalar_lea.vmem %s0, %s15
    %s17 = sadd.s32 0, 0
    %p18 = scmp.lt.s32.totalorder %s17, 0
    %s19 = scalar_select %p18, %s17, 0
    %s20 = smul.u32 2, %s19
  $region5: #{_loss_fn.1} parent=0 // pred_fallthru
    _
  // Predicated region
  $region6: #{_loss_fn.1} parent=0 // pred_check
    _
  $region7: #{_loss_fn.1} parent=0 // pred_check_branch
    %22 = sbr.rel (0) target = $region9
  $region8: #{_loss_fn.1} parent=0 // pred_region
    %s23 = sadd.s32 0, 0
    %p24 = scmp.lt.s32.totalorder %s23, 0
    %s25 = scalar_select %p24, %s23, 0
    %s26 = smul.u32 2, %s25
    %p27 = scmp.lt.s32.totalorder %s26, 1
    %s28 = scalar_select %p27, %s26, 1
    %s29 = smul.addr %s28, 8
    %s30 = scalar_lea.vmem %s1, %s29
    %s31 = sadd.s32 0, 0
    %p32 = scmp.lt.s32.totalorder %s31, 0
    %s33 = scalar_select %p32, %s31, 0
    %s34 = smul.u32 2, %s33
  $region9: #{_loss_fn.1} parent=0 // pred_fallthru
    _
  %s35 = sadd.s32 0, 0
  %p36 = scmp.lt.s32.totalorder %s35, 0
  %s37 = scalar_select %p36, %s35, 0
  %s38 = smul.u32 2, %s37
  %p39 = scmp.lt.s32.totalorder %s38, 1
  %s40 = scalar_select %p39, %s38, 1
  %s41 = smul.addr %s40, 8
  %s42 = scalar_lea.vmem %s0, %s41
  %s43 = sadd.s32 0, 0
  %p44 = scmp.lt.s32.totalorder %s43, 0
  %s45 = scalar_select %p44, %s43, 0
  %s46 = smul.u32 2, %s45
  %p47 = scmp.lt.s32.totalorder %s46, 1
  %s48 = scalar_select %p47, %s46, 1
  %s49 = smul.addr %s48, 8
  %s50 = scalar_lea.vmem %s1, %s49
  %s51 = sadd.s32 0, 0
  %p52 = scmp.lt.s32.totalorder %s51, 0
  %s53 = scalar_select %p52, %s51, 0
  %s54 = smul.u32 2, %s53
  %p55 = scmp.lt.s32.totalorder %s54, 1
  %s56 = scalar_select %p55, %s54, 1
  %s57 = smul.addr %s56, 8
  %s58 = scalar_lea.vmem %s0, %s57
  %s59 = sadd.s32 0, 0
  %p60 = scmp.lt.s32.totalorder %s59, 0
  %s61 = scalar_select %p60, %s59, 0
  %s62 = smul.u32 2, %s61
  %s63 = sadd.s32 0, 0
  %p64 = scmp.lt.s32.totalorder %s63, 0
  %s65 = scalar_select %p64, %s63, 0
  %s66 = smul.u32 2, %s65
  %p67 = scmp.lt.s32.totalorder %s66, 1
  %s68 = scalar_select %p67, %s66, 1
  %s69 = smul.addr %s68, 8
  %s70 = scalar_lea.vmem %s1, %s69
  %s71 = sadd.s32 0, 0
  %p72 = scmp.lt.s32.totalorder %s71, 0
  %s73 = scalar_select %p72, %s71, 0
  %s74 = smul.u32 2, %s73
  %p75 = scmp.eq.s32.totalorder 0, 0
  // Predicated region
  $region10: #{_loss_fn.1} parent=0 // pred_check
    %p76 = pneg %p75
  $region11: #{_loss_fn.1} parent=0 // pred_check_branch
    %78 = sbr.rel (%p76) target = $region13
  $region12: #{_loss_fn.1} parent=0 // pred_region
    %79 = vst [vmem:[%s2] sm:$0xff] 0.0
  $region13: #{_loss_fn.1} parent=0 // pred_fallthru
    _
  %v80 = vld [vmem:[%s58] sm:$0xff]
  %v81 = vld [vmem:[%s58 + $0x8] sm:$0xff]
  %v82 = vmul.f32 %v80, 0.5
  %v83 = vmul.f32 %v81, 0.5
  %v84 = vld [vmem:[%s70] sm:$0xff]
  %v85 = vld [vmem:[%s70 + $0x8] sm:$0xff]
  %v86 = vsub.f32 %v82, %v84
  %v87 = vsub.f32 %v83, %v85
  %v88 = vmul.f32 %v86, %v86
  %v89 = vmul.f32 %v87, %v87
  %v90 = vld [vmem:[%s2] sm:$0xff]
  %v91 = vadd.f32 %v88, %v89
  %v92 = vadd.f32 %v90, %v91
  %93 = vst [vmem:[%s2] sm:$0xff] %v92
  // Predicated region
  $region14: #{_loss_fn.1} parent=0 // pred_check
    _
  $region15: #{_loss_fn.1} parent=0 // pred_check_branch
    %95 = sbr.rel (0) target = $region17
  $region16: #{_loss_fn.1} parent=0 // pred_region
    _
  $region17: #{_loss_fn.1} parent=0 // pred_fallthru
    _
  // Predicated region
  $region18: #{_loss_fn.1} parent=0 // pred_check
    _
  $region19: #{_loss_fn.1} parent=0 // pred_check_branch
    %97 = sbr.rel (0) target = $region21
  $region20: #{_loss_fn.1} parent=0 // pred_region
    _
  $region21: #{_loss_fn.1} parent=0 // pred_fallthru
    _

</llo_original>
